<compile_context>
chip_gen: v7x
topology: tpu7x:2x2x1
jax: 0.10.0
libtpu: 0.0.40
codegen_flags: <defaults>
</compile_context>

<pallas_src>
import math
from collections import namedtuple

import jax
import jax.numpy as jnp
from jax import lax
from jax.experimental import pallas as pl
from jax.experimental.pallas import tpu as pltpu

_EPS = 1.1920929e-07  # torch.finfo(torch.float32).eps, used by pypose branches


# ------------------------------ kernel helpers --------------------------------
def _recip(x):
    """1/x via the EUP approximate reciprocal + one Newton-Raphson refinement.

    ~f32-accurate, and moves the divide off the (bottleneck) VALU slots onto the
    otherwise-idle EUP slot (perf-review opt #4/#5)."""
    r = pl.reciprocal(x, approx=True)
    return r * (2.0 - x * r)


def _atan_poly(x):
    """float32 arctan (Cephes atanf style): range reduction + odd polynomial.

    Built only from +,-,*,abs,where and one EUP reciprocal so it lowers cleanly
    through Mosaic."""
    sgn = jnp.where(x < 0, -1.0, 1.0).astype(x.dtype)
    ax = jnp.abs(x)
    big = ax > 2.414213562373095       # tan(3*pi/8)
    mid = ax > 0.4142135623730951      # tan(pi/8)
    denom = jnp.where(big, ax, jnp.where(mid, ax + 1.0, 1.0))  # always >= 1
    inv_d = _recip(denom)
    t = jnp.where(big, -inv_d, jnp.where(mid, (ax - 1.0) * inv_d, ax))
    y0 = jnp.where(big, jnp.float32(math.pi / 2),
                   jnp.where(mid, jnp.float32(math.pi / 4), jnp.float32(0.0)))
    z = t * t
    poly = (((8.05374449538e-2 * z - 1.38776856032e-1) * z
             + 1.99777106478e-1) * z - 3.33329491539e-1) * z * t + t
    return sgn * (y0 + poly)


# ----------------------------------- kernel -----------------------------------
def _invnet_kernel(pose_ref, x_ref, out_ref):
    # pose_ref, x_ref: (7, R, 128) SoA blocks = [tx,ty,tz,qx,qy,qz,qw]
    # out_ref:         (6, R, 128) SoA block  = [rho(3), phi(3)]
    ptx, pty, ptz = pose_ref[0], pose_ref[1], pose_ref[2]
    pqx, pqy, pqz, pqw = pose_ref[3], pose_ref[4], pose_ref[5], pose_ref[6]
    xtx, xty, xtz = x_ref[0], x_ref[1], x_ref[2]
    xqx, xqy, xqz, xqw = x_ref[3], x_ref[4], x_ref[5], x_ref[6]

    # ---------- SE3 composition: y = pose @ input ----------------------------
    # rotate input translation by pose quaternion: R(q) t = t + 2w(v x t) + 2 v x (v x t)
    cx = pqy * xtz - pqz * xty
    cy = pqz * xtx - pqx * xtz
    cz = pqx * xty - pqy * xtx
    dx = pqy * cz - pqz * cy
    dy = pqz * cx - pqx * cz
    dz = pqx * cy - pqy * cx
    tx = ptx + xtx + 2.0 * (pqw * cx + dx)
    ty = pty + xty + 2.0 * (pqw * cy + dy)
    tz = ptz + xtz + 2.0 * (pqw * cz + dz)
    # Hamilton quaternion product, [x, y, z, w] storage: q = pq * xq
    qx = pqw * xqx + pqx * xqw + pqy * xqz - pqz * xqy
    qy = pqw * xqy - pqx * xqz + pqy * xqw + pqz * xqx
    qz = pqw * xqz + pqx * xqy - pqy * xqx + pqz * xqw
    qw = pqw * xqw - pqx * xqx - pqy * xqy - pqz * xqz

    # ---------- SO3 Log of rotation part -> phi (pypose / Sophus branches) ---
    n2 = qx * qx + qy * qy + qz * qz
    inv_n = lax.rsqrt(jnp.maximum(n2, 1e-30))   # = 1/||q_vec|| on the live branches
    n = n2 * inv_n                              # = ||q_vec||
    w_safe = jnp.where(jnp.abs(qw) > _EPS, qw, 1.0)
    inv_w = _recip(w_safe)
    factor_generic = 2.0 * _atan_poly(n * inv_w) * inv_n
    factor_wzero = jnp.where(qw > 0, jnp.float32(math.pi),
                             jnp.float32(-math.pi)) * inv_n
    factor_taylor = 2.0 * inv_w - (2.0 / 3.0) * n2 * inv_w * inv_w * inv_w
    factor = jnp.where(
        n > _EPS,
        jnp.where(jnp.abs(qw) > _EPS, factor_generic, factor_wzero),
        factor_taylor)
    phx = factor * qx
    phy = factor * qy
    phz = factor * qz

    # ---------- rho = Jl_inv(phi) @ t ----------------------------------------
    # Jl_inv = I - 0.5*Phi + coef*Phi^2 with
    #   coef = 1/theta^2 - (1+cos theta)/(2 theta sin theta)   (-> 1/12 near 0).
    # Using half-angle identities and the unit quaternion,
    #   (1+cos a)/(2 a sin a) = cos(a/2)/(2 a sin(a/2)) = qw/(2 a n),
    # which is cancellation-free near a = pi and needs no trig / extra divides.
    alpha = factor * n                           # signed rotation angle
    use_series = jnp.abs(alpha) <= _EPS
    a_safe = jnp.where(use_series, 1.0, alpha)
    inv_a = _recip(a_safe)
    coef = jnp.where(use_series, jnp.float32(1.0 / 12.0),
                     inv_a * inv_a - 0.5 * qw * inv_a * inv_n)

    ax_ = phy * tz - phz * ty          # phi x t
    ay_ = phz * tx - phx * tz
    az_ = phx * ty - phy * tx
    bx_ = phy * az_ - phz * ay_        # phi x (phi x t)
    by_ = phz * ax_ - phx * az_
    bz_ = phx * ay_ - phy * ax_
    rx = tx - 0.5 * ax_ + coef * bx_
    ry = ty - 0.5 * ay_ + coef * by_
    rz = tz - 0.5 * az_ + coef * bz_

    # Dense full-lane-row stores (no masking, minimal store-slot pressure).
    odt = out_ref.dtype
    out_ref[0] = rx.astype(odt)
    out_ref[1] = ry.astype(odt)
    out_ref[2] = rz.astype(odt)
    out_ref[3] = phx.astype(odt)
    out_ref[4] = phy.astype(odt)
    out_ref[5] = phz.astype(odt)


# ------------------------------ tiling / layout --------------------------------
_Plan = namedtuple("_Plan", "tile npad rows tile_rows grid")


def _make_plan(n, tile_elems=131072, sublane_granule=8):
    """Choose the batch tile (elements per grid step).

    * tile is a multiple of one (granule,128) register tile,
    * tile <= tile_elems (default 131072 => ~20 MiB double-buffered, safe
      within v7x's 64 MiB VMEM),
    * when the batch allows it, >=2 grid steps are produced so both v7x
      TensorCores get work under dimension_semantics=("parallel",),
    * steps are balanced so tail padding stays minimal."""
    min_tile = sublane_granule * 128
    tile_elems = max(min_tile, (int(tile_elems) // min_tile) * min_tile)
    npad_min = -(-n // min_tile) * min_tile
    steps = -(-npad_min // tile_elems)
    if npad_min >= 2 * min_tile:
        steps = max(steps, 2)                      # keep both v7x TCs busy
    per_step = -(-npad_min // steps)
    tile = -(-per_step // min_tile) * min_tile
    steps = -(-npad_min // tile)
    npad = steps * tile
    return _Plan(tile=tile, npad=npad, rows=npad // 128,
                 tile_rows=tile // 128, grid=(steps,))


def _to_soa(a, npad):
    """(n, C) AoS -> (C, npad//128, 128) lane-dense SoA slab.

    Transpose-then-pad so XLA fuses the zero padding into the single relayout
    copy.  Zero-padded lanes compose to finite outputs and are discarded."""
    n, c = a.shape
    a = jnp.asarray(a, jnp.float32).T              # (C, n)
    if npad != n:
        a = jnp.pad(a, ((0, 0), (0, npad - n)))
    return a.reshape(c, npad // 128, 128)


def _from_soa(out_soa, n, batch):
    flat = out_soa.reshape(6, -1)[:, :n].T
    return flat.reshape(batch + (6,))


def _soa_forward(pose_soa, x_soa, plan, out_dtype=jnp.float32):
    """Run the Pallas kernel on lane-dense SoA slabs; returns (6, rows, 128)."""
    return pl.pallas_call(
        _invnet_kernel,
        out_shape=jax.ShapeDtypeStruct((6, plan.rows, 128), out_dtype),
        grid=plan.grid,
        in_specs=[pl.BlockSpec((7, plan.tile_rows, 128), lambda i: (0, i, 0)),
                  pl.BlockSpec((7, plan.tile_rows, 128), lambda i: (0, i, 0))],
        out_specs=pl.BlockSpec((6, plan.tile_rows, 128), lambda i: (0, i, 0)),
        compiler_params=pltpu.CompilerParams(
            dimension_semantics=("parallel",),     # shard grid steps across TCs (v7x)
            vmem_limit_bytes=40 * 1024 * 1024),    # stays < v7x's 48 MiB ceiling
    )(pose_soa, x_soa)


# ------------------------------ public interfaces ------------------------------
def invnet_forward(pose, x, *, tile_elems=131072, out_dtype=jnp.float32):
    """Functional form: error = (pose @ x).Log() for SE3 (..., 7) -> (..., 6)."""
    assert pose.shape == x.shape and pose.shape[-1] == 7
    batch = pose.shape[:-1]
    n = int(math.prod(batch)) if batch else 1
    granule = 8 * (4 // max(1, jnp.dtype(out_dtype).itemsize))
    plan = _make_plan(n, tile_elems, sublane_granule=max(8, granule))
    pose_soa = _to_soa(jnp.asarray(pose, jnp.float32).reshape(n, 7), plan.npad)
    x_soa = _to_soa(jnp.asarray(x, jnp.float32).reshape(n, 7), plan.npad)
    out_soa = _soa_forward(pose_soa, x_soa, plan, out_dtype)
    return _from_soa(out_soa, n, batch)


class InvNet:
    """Pallas analogue of the pypose InvNet module: forward(x) = (pose @ x).Log().

    The pose parameter's AoS->SoA relayout happens once here (not per call);
    pass soa_output=True to keep the lane-dense (6, npad//128, 128) output and
    skip the un-transpose entirely (SoA end-to-end fast path).
    """
    # TODO(synk): parameter registration / autograd (pp.Parameter) is out of scope;
    # only the forward pass is implemented.

    def __init__(self, *dim, key=None, tile_elems=131072, out_dtype=jnp.float32):
        if key is None:
            key = jax.random.PRNGKey(0)
        self.dim = tuple(dim)
        self.out_dtype = out_dtype
        self.pose = _randn_se3(key, self.dim)             # (*dim, 7) parameter
        self._n = int(math.prod(self.dim)) if self.dim else 1
        granule = 8 * (4 // max(1, jnp.dtype(out_dtype).itemsize))
        self._plan = _make_plan(self._n, tile_elems, sublane_granule=max(8, granule))
        # Parameter relayout done ONCE (perf-review opt #1a).
        self._pose_soa = _to_soa(self.pose.reshape(self._n, 7), self._plan.npad)

    def forward(self, x, *, soa_output=False):
        assert x.shape == self.dim + (7,), x.shape
        x_soa = _to_soa(jnp.asarray(x, jnp.float32).reshape(self._n, 7),
                        self._plan.npad)
        out_soa = _soa_forward(self._pose_soa, x_soa, self._plan, self.out_dtype)
        if soa_output:
            return out_soa                     # (6, npad//128, 128), lanes >= n padded
        return _from_soa(out_soa, self._n, self.dim)

    def forward_soa(self, x_soa):
        """SoA-in / SoA-out fast path (no wrapper transposes at all)."""
        assert x_soa.shape == (7, self._plan.rows, 128), x_soa.shape
        return _soa_forward(self._pose_soa, x_soa, self._plan, self.out_dtype)

    __call__ = forward


# ----------------------------- pure-JAX reference -----------------------------
def _quat_mul(a, b):
    ax, ay, az, aw = (a[..., i:i + 1] for i in range(4))
    bx, by, bz, bw = (b[..., i:i + 1] for i in range(4))
    return jnp.concatenate([
        aw * bx + ax * bw + ay * bz - az * by,
        aw * by - ax * bz + ay * bw + az * bx,
        aw * bz + ax * by - ay * bx + az * bw,
        aw * bw - ax * bx - ay * by - az * bz], axis=-1)


def _quat_rotate(q, t):
    v, w = q[..., :3], q[..., 3:4]
    c = jnp.cross(v, t)
    return t + 2.0 * (w * c + jnp.cross(v, c))


def invnet_reference(pose, x):
    t = pose[..., :3] + _quat_rotate(pose[..., 3:], x[..., :3])
    q = _quat_mul(pose[..., 3:], x[..., 3:])
    v, w = q[..., :3], q[..., 3:4]
    n = jnp.linalg.norm(v, axis=-1, keepdims=True)
    factor = jnp.where(
        n > _EPS,
        jnp.where(jnp.abs(w) > _EPS,
                  2.0 * jnp.arctan(n / w) / n,
                  jnp.where(w > 0, jnp.pi, -jnp.pi) / n),
        2.0 / w - 2.0 * n * n / (3.0 * w ** 3))
    phi = factor * v
    theta = jnp.linalg.norm(phi, axis=-1, keepdims=True)
    # (1+cos t)/(2 t sin t) == cos(t/2)/(2 t sin(t/2)) : identical, but stable near pi.
    coef = jnp.where(
        theta > _EPS,
        1.0 / theta ** 2
        - jnp.cos(0.5 * theta) / (2.0 * theta * jnp.sin(0.5 * theta)),
        1.0 / 12.0)
    rho = t - 0.5 * jnp.cross(phi, t) + coef * jnp.cross(phi, jnp.cross(phi, t))
    return jnp.concatenate([rho, phi], axis=-1)


def _randn_se3(key, dim):
    """Deterministic stand-in for pp.randn_SE3(*dim): random translation +
    random unit quaternion, stored as [tx,ty,tz,qx,qy,qz,qw]."""
    kt, kq = jax.random.split(key)
    t = jax.random.normal(kt, dim + (3,), dtype=jnp.float32)
    q = jax.random.normal(kq, dim + (4,), dtype=jnp.float32)
    q = q / jnp.linalg.norm(q, axis=-1, keepdims=True)
    return jnp.concatenate([t, q], axis=-1)


if __name__ == "__main__":
    key = jax.random.PRNGKey(0)
    kpose, kx, kpose2, kx2 = jax.random.split(key, 4)

    # Small demo matching InvNet(2, 2) / pp.randn_SE3(2, 2).
    net = InvNet(2, 2, key=kpose)
    x = _randn_se3(kx, (2, 2))
    out = jax.block_until_ready(net(x))
    ref = invnet_reference(net.pose, x)
    assert out.shape == (2, 2, 6), out.shape
    assert bool(jnp.all(jnp.isfinite(out)))
    err = float(jnp.max(jnp.abs(out - ref)))
    assert err < 1e-4, f"small-batch max abs error {err}"

    # Larger batch exercising the tiled, double-buffered multi-step grid.
    dim2 = (32, 128)                    # 4096 elements -> 4 grid steps at tile_elems=1024
    net2 = InvNet(*dim2, key=kpose2, tile_elems=1024)
    x2 = _randn_se3(kx2, dim2)
    out2 = jax.block_until_ready(net2(x2))
    ref2 = invnet_reference(net2.pose, x2)
    assert out2.shape == dim2 + (6,), out2.shape
    assert bool(jnp.all(jnp.isfinite(out2)))
    err2 = float(jnp.max(jnp.abs(out2 - ref2)))
    assert err2 < 5e-4, f"large-batch max abs error {err2}"

    # Functional one-shot path matches the module path exactly.
    out2_fn = jax.block_until_ready(invnet_forward(net2.pose, x2, tile_elems=1024))
    assert float(jnp.max(jnp.abs(out2_fn - out2))) == 0.0

    # SoA end-to-end fast path (perf-review opt #1b): consumer keeps the
    # lane-dense layout, no output un-transpose.
    out2_soa = jax.block_until_ready(net2.forward(x2, soa_output=True))
    assert out2_soa.shape == (6, net2._plan.rows, 128), out2_soa.shape
    assert bool(jnp.all(jnp.isfinite(out2_soa)))

    print("KERNEL_OK")
</pallas_src>

<mosaic_0001>
module attributes {stable_mosaic.version = 11 : i64} {
  func.func @_invnet_kernel(%arg0: i32, %arg1: memref<7x8x128xf32, #tpu.memory_space<vmem>>, %arg2: memref<7x8x128xf32, #tpu.memory_space<vmem>>, %arg3: memref<6x8x128xf32, #tpu.memory_space<vmem>>) attributes {dimension_semantics = [#tpu.dimension_semantics<parallel>], iteration_bounds = array<i64: 1>, scalar_prefetch = 0 : i64, scratch_operands = 0 : i64, tpu.core_type = #tpu.core_type<tc>, window_params = [{transform_indices = @transform_0, window_bounds = array<i64: 7, 8, 128>}, {transform_indices = @transform_1, window_bounds = array<i64: 7, 8, 128>}, {transform_indices = @transform_2, window_bounds = array<i64: 6, 8, 128>}]} {
    %c0 = arith.constant 0 : index
    %c0_0 = arith.constant 0 : index
    %c0_1 = arith.constant 0 : index
    %0 = vector.load %arg1[%c0, %c0_0, %c0_1] : memref<7x8x128xf32, #tpu.memory_space<vmem>>, vector<1x8x128xf32>
    %1 = vector.shape_cast %0 : vector<1x8x128xf32> to vector<8x128xf32>
    %c1 = arith.constant 1 : index
    %c0_2 = arith.constant 0 : index
    %c0_3 = arith.constant 0 : index
    %2 = vector.load %arg1[%c1, %c0_2, %c0_3] : memref<7x8x128xf32, #tpu.memory_space<vmem>>, vector<1x8x128xf32>
    %3 = vector.shape_cast %2 : vector<1x8x128xf32> to vector<8x128xf32>
    %c2 = arith.constant 2 : index
    %c0_4 = arith.constant 0 : index
    %c0_5 = arith.constant 0 : index
    %4 = vector.load %arg1[%c2, %c0_4, %c0_5] : memref<7x8x128xf32, #tpu.memory_space<vmem>>, vector<1x8x128xf32>
    %5 = vector.shape_cast %4 : vector<1x8x128xf32> to vector<8x128xf32>
    %c3 = arith.constant 3 : index
    %c0_6 = arith.constant 0 : index
    %c0_7 = arith.constant 0 : index
    %6 = vector.load %arg1[%c3, %c0_6, %c0_7] : memref<7x8x128xf32, #tpu.memory_space<vmem>>, vector<1x8x128xf32>
    %7 = vector.shape_cast %6 : vector<1x8x128xf32> to vector<8x128xf32>
    %c4 = arith.constant 4 : index
    %c0_8 = arith.constant 0 : index
    %c0_9 = arith.constant 0 : index
    %8 = vector.load %arg1[%c4, %c0_8, %c0_9] : memref<7x8x128xf32, #tpu.memory_space<vmem>>, vector<1x8x128xf32>
    %9 = vector.shape_cast %8 : vector<1x8x128xf32> to vector<8x128xf32>
    %c5 = arith.constant 5 : index
    %c0_10 = arith.constant 0 : index
    %c0_11 = arith.constant 0 : index
    %10 = vector.load %arg1[%c5, %c0_10, %c0_11] : memref<7x8x128xf32, #tpu.memory_space<vmem>>, vector<1x8x128xf32>
    %11 = vector.shape_cast %10 : vector<1x8x128xf32> to vector<8x128xf32>
    %c6 = arith.constant 6 : index
    %c0_12 = arith.constant 0 : index
    %c0_13 = arith.constant 0 : index
    %12 = vector.load %arg1[%c6, %c0_12, %c0_13] : memref<7x8x128xf32, #tpu.memory_space<vmem>>, vector<1x8x128xf32>
    %13 = vector.shape_cast %12 : vector<1x8x128xf32> to vector<8x128xf32>
    %c0_14 = arith.constant 0 : index
    %c0_15 = arith.constant 0 : index
    %c0_16 = arith.constant 0 : index
    %14 = vector.load %arg2[%c0_14, %c0_15, %c0_16] : memref<7x8x128xf32, #tpu.memory_space<vmem>>, vector<1x8x128xf32>
    %15 = vector.shape_cast %14 : vector<1x8x128xf32> to vector<8x128xf32>
    %c1_17 = arith.constant 1 : index
    %c0_18 = arith.constant 0 : index
    %c0_19 = arith.constant 0 : index
    %16 = vector.load %arg2[%c1_17, %c0_18, %c0_19] : memref<7x8x128xf32, #tpu.memory_space<vmem>>, vector<1x8x128xf32>
    %17 = vector.shape_cast %16 : vector<1x8x128xf32> to vector<8x128xf32>
    %c2_20 = arith.constant 2 : index
    %c0_21 = arith.constant 0 : index
    %c0_22 = arith.constant 0 : index
    %18 = vector.load %arg2[%c2_20, %c0_21, %c0_22] : memref<7x8x128xf32, #tpu.memory_space<vmem>>, vector<1x8x128xf32>
    %19 = vector.shape_cast %18 : vector<1x8x128xf32> to vector<8x128xf32>
    %c3_23 = arith.constant 3 : index
    %c0_24 = arith.constant 0 : index
    %c0_25 = arith.constant 0 : index
    %20 = vector.load %arg2[%c3_23, %c0_24, %c0_25] : memref<7x8x128xf32, #tpu.memory_space<vmem>>, vector<1x8x128xf32>
    %21 = vector.shape_cast %20 : vector<1x8x128xf32> to vector<8x128xf32>
    %c4_26 = arith.constant 4 : index
    %c0_27 = arith.constant 0 : index
    %c0_28 = arith.constant 0 : index
    %22 = vector.load %arg2[%c4_26, %c0_27, %c0_28] : memref<7x8x128xf32, #tpu.memory_space<vmem>>, vector<1x8x128xf32>
    %23 = vector.shape_cast %22 : vector<1x8x128xf32> to vector<8x128xf32>
    %c5_29 = arith.constant 5 : index
    %c0_30 = arith.constant 0 : index
    %c0_31 = arith.constant 0 : index
    %24 = vector.load %arg2[%c5_29, %c0_30, %c0_31] : memref<7x8x128xf32, #tpu.memory_space<vmem>>, vector<1x8x128xf32>
    %25 = vector.shape_cast %24 : vector<1x8x128xf32> to vector<8x128xf32>
    %c6_32 = arith.constant 6 : index
    %c0_33 = arith.constant 0 : index
    %c0_34 = arith.constant 0 : index
    %26 = vector.load %arg2[%c6_32, %c0_33, %c0_34] : memref<7x8x128xf32, #tpu.memory_space<vmem>>, vector<1x8x128xf32>
    %27 = vector.shape_cast %26 : vector<1x8x128xf32> to vector<8x128xf32>
    %28 = arith.mulf %9, %19 : vector<8x128xf32>
    %29 = arith.mulf %11, %17 : vector<8x128xf32>
    %30 = arith.subf %28, %29 : vector<8x128xf32>
    %31 = arith.mulf %11, %15 : vector<8x128xf32>
    %32 = arith.mulf %7, %19 : vector<8x128xf32>
    %33 = arith.subf %31, %32 : vector<8x128xf32>
    %34 = arith.mulf %7, %17 : vector<8x128xf32>
    %35 = arith.mulf %9, %15 : vector<8x128xf32>
    %36 = arith.subf %34, %35 : vector<8x128xf32>
    %37 = arith.mulf %9, %36 : vector<8x128xf32>
    %38 = arith.mulf %11, %33 : vector<8x128xf32>
    %39 = arith.subf %37, %38 : vector<8x128xf32>
    %40 = arith.mulf %11, %30 : vector<8x128xf32>
    %41 = arith.mulf %7, %36 : vector<8x128xf32>
    %42 = arith.subf %40, %41 : vector<8x128xf32>
    %43 = arith.mulf %7, %33 : vector<8x128xf32>
    %44 = arith.mulf %9, %30 : vector<8x128xf32>
    %45 = arith.subf %43, %44 : vector<8x128xf32>
    %46 = arith.addf %1, %15 : vector<8x128xf32>
    %47 = arith.mulf %13, %30 : vector<8x128xf32>
    %48 = arith.addf %47, %39 : vector<8x128xf32>
    %cst = arith.constant 2.000000e+00 : f32
    %49 = vector.broadcast %cst : f32 to vector<8x128xf32>
    %50 = arith.mulf %49, %48 : vector<8x128xf32>
    %51 = arith.addf %46, %50 : vector<8x128xf32>
    %52 = arith.addf %3, %17 : vector<8x128xf32>
    %53 = arith.mulf %13, %33 : vector<8x128xf32>
    %54 = arith.addf %53, %42 : vector<8x128xf32>
    %cst_35 = arith.constant 2.000000e+00 : f32
    %55 = vector.broadcast %cst_35 : f32 to vector<8x128xf32>
    %56 = arith.mulf %55, %54 : vector<8x128xf32>
    %57 = arith.addf %52, %56 : vector<8x128xf32>
    %58 = arith.addf %5, %19 : vector<8x128xf32>
    %59 = arith.mulf %13, %36 : vector<8x128xf32>
    %60 = arith.addf %59, %45 : vector<8x128xf32>
    %cst_36 = arith.constant 2.000000e+00 : f32
    %61 = vector.broadcast %cst_36 : f32 to vector<8x128xf32>
    %62 = arith.mulf %61, %60 : vector<8x128xf32>
    %63 = arith.addf %58, %62 : vector<8x128xf32>
    %64 = arith.mulf %13, %21 : vector<8x128xf32>
    %65 = arith.mulf %7, %27 : vector<8x128xf32>
    %66 = arith.addf %64, %65 : vector<8x128xf32>
    %67 = arith.mulf %9, %25 : vector<8x128xf32>
    %68 = arith.addf %66, %67 : vector<8x128xf32>
    %69 = arith.mulf %11, %23 : vector<8x128xf32>
    %70 = arith.subf %68, %69 : vector<8x128xf32>
    %71 = arith.mulf %13, %23 : vector<8x128xf32>
    %72 = arith.mulf %7, %25 : vector<8x128xf32>
    %73 = arith.subf %71, %72 : vector<8x128xf32>
    %74 = arith.mulf %9, %27 : vector<8x128xf32>
    %75 = arith.addf %73, %74 : vector<8x128xf32>
    %76 = arith.mulf %11, %21 : vector<8x128xf32>
    %77 = arith.addf %75, %76 : vector<8x128xf32>
    %78 = arith.mulf %13, %25 : vector<8x128xf32>
    %79 = arith.mulf %7, %23 : vector<8x128xf32>
    %80 = arith.addf %78, %79 : vector<8x128xf32>
    %81 = arith.mulf %9, %21 : vector<8x128xf32>
    %82 = arith.subf %80, %81 : vector<8x128xf32>
    %83 = arith.mulf %11, %27 : vector<8x128xf32>
    %84 = arith.addf %82, %83 : vector<8x128xf32>
    %85 = arith.mulf %13, %27 : vector<8x128xf32>
    %86 = arith.mulf %7, %21 : vector<8x128xf32>
    %87 = arith.subf %85, %86 : vector<8x128xf32>
    %88 = arith.mulf %9, %23 : vector<8x128xf32>
    %89 = arith.subf %87, %88 : vector<8x128xf32>
    %90 = arith.mulf %11, %25 : vector<8x128xf32>
    %91 = arith.subf %89, %90 : vector<8x128xf32>
    %92 = arith.mulf %70, %70 : vector<8x128xf32>
    %93 = arith.mulf %77, %77 : vector<8x128xf32>
    %94 = arith.addf %92, %93 : vector<8x128xf32>
    %95 = arith.mulf %84, %84 : vector<8x128xf32>
    %96 = arith.addf %94, %95 : vector<8x128xf32>
    %cst_37 = arith.constant 1.000000e-30 : f32
    %97 = vector.broadcast %cst_37 : f32 to vector<8x128xf32>
    %98 = arith.maximumf %96, %97 : vector<8x128xf32>
    %99 = math.rsqrt %98 : vector<8x128xf32>
    %100 = arith.mulf %96, %99 : vector<8x128xf32>
    %101 = math.absf %91 : vector<8x128xf32>
    %cst_38 = arith.constant 1.1920929E-7 : f32
    %102 = vector.broadcast %cst_38 : f32 to vector<8x128xf32>
    %103 = arith.cmpf ogt, %101, %102 : vector<8x128xf32>
    %cst_39 = arith.constant 1.000000e+00 : f32
    %104 = vector.broadcast %cst_39 : f32 to vector<8x128xf32>
    %105 = arith.select %103, %91, %104 : vector<8x128xi1>, vector<8x128xf32>
    %106 = tpu.reciprocal %105 {approx = true} : vector<8x128xf32> -> vector<8x128xf32>
    %107 = arith.mulf %105, %106 : vector<8x128xf32>
    %cst_40 = arith.constant 2.000000e+00 : f32
    %108 = vector.broadcast %cst_40 : f32 to vector<8x128xf32>
    %109 = arith.subf %108, %107 : vector<8x128xf32>
    %110 = arith.mulf %106, %109 : vector<8x128xf32>
    %111 = arith.mulf %100, %110 : vector<8x128xf32>
    %cst_41 = arith.constant 0.000000e+00 : f32
    %112 = vector.broadcast %cst_41 : f32 to vector<8x128xf32>
    %113 = arith.cmpf olt, %111, %112 : vector<8x128xf32>
    %cst_42 = arith.constant -1.000000e+00 : f32
    %cst_43 = arith.constant 1.000000e+00 : f32
    %114 = vector.broadcast %cst_42 : f32 to vector<8x128xf32>
    %115 = vector.broadcast %cst_43 : f32 to vector<8x128xf32>
    %116 = arith.select %113, %114, %115 : vector<8x128xi1>, vector<8x128xf32>
    %117 = math.absf %111 : vector<8x128xf32>
    %cst_44 = arith.constant 2.41421366 : f32
    %118 = vector.broadcast %cst_44 : f32 to vector<8x128xf32>
    %119 = arith.cmpf ogt, %117, %118 : vector<8x128xf32>
    %cst_45 = arith.constant 0.414213568 : f32
    %120 = vector.broadcast %cst_45 : f32 to vector<8x128xf32>
    %121 = arith.cmpf ogt, %117, %120 : vector<8x128xf32>
    %cst_46 = arith.constant 1.000000e+00 : f32
    %122 = vector.broadcast %cst_46 : f32 to vector<8x128xf32>
    %123 = arith.addf %117, %122 : vector<8x128xf32>
    %cst_47 = arith.constant 1.000000e+00 : f32
    %124 = vector.broadcast %cst_47 : f32 to vector<8x128xf32>
    %125 = arith.select %121, %123, %124 : vector<8x128xi1>, vector<8x128xf32>
    %126 = arith.select %119, %117, %125 : vector<8x128xi1>, vector<8x128xf32>
    %127 = tpu.reciprocal %126 {approx = true} : vector<8x128xf32> -> vector<8x128xf32>
    %128 = arith.mulf %126, %127 : vector<8x128xf32>
    %cst_48 = arith.constant 2.000000e+00 : f32
    %129 = vector.broadcast %cst_48 : f32 to vector<8x128xf32>
    %130 = arith.subf %129, %128 : vector<8x128xf32>
    %131 = arith.mulf %127, %130 : vector<8x128xf32>
    %cst_49 = arith.constant 0.000000e+00 : f32
    %132 = vector.broadcast %cst_49 : f32 to vector<8x128xf32>
    %133 = arith.subf %132, %131 : vector<8x128xf32>
    %cst_50 = arith.constant 1.000000e+00 : f32
    %134 = vector.broadcast %cst_50 : f32 to vector<8x128xf32>
    %135 = arith.subf %117, %134 : vector<8x128xf32>
    %136 = arith.mulf %135, %131 : vector<8x128xf32>
    %137 = arith.select %121, %136, %117 : vector<8x128xi1>, vector<8x128xf32>
    %138 = arith.select %119, %133, %137 : vector<8x128xi1>, vector<8x128xf32>
    %cst_51 = arith.constant 0.785398185 : f32
    %cst_52 = arith.constant 0.000000e+00 : f32
    %139 = vector.broadcast %cst_51 : f32 to vector<8x128xf32>
    %140 = vector.broadcast %cst_52 : f32 to vector<8x128xf32>
    %141 = arith.select %121, %139, %140 : vector<8x128xi1>, vector<8x128xf32>
    %cst_53 = arith.constant 1.57079637 : f32
    %142 = vector.broadcast %cst_53 : f32 to vector<8x128xf32>
    %143 = arith.select %119, %142, %141 : vector<8x128xi1>, vector<8x128xf32>
    %144 = arith.mulf %138, %138 : vector<8x128xf32>
    %cst_54 = arith.constant 0.0805374458 : f32
    %145 = vector.broadcast %cst_54 : f32 to vector<8x128xf32>
    %146 = arith.mulf %145, %144 : vector<8x128xf32>
    %cst_55 = arith.constant 0.138776854 : f32
    %147 = vector.broadcast %cst_55 : f32 to vector<8x128xf32>
    %148 = arith.subf %146, %147 : vector<8x128xf32>
    %149 = arith.mulf %148, %144 : vector<8x128xf32>
    %cst_56 = arith.constant 0.199777111 : f32
    %150 = vector.broadcast %cst_56 : f32 to vector<8x128xf32>
    %151 = arith.addf %149, %150 : vector<8x128xf32>
    %152 = arith.mulf %151, %144 : vector<8x128xf32>
    %cst_57 = arith.constant 0.333329499 : f32
    %153 = vector.broadcast %cst_57 : f32 to vector<8x128xf32>
    %154 = arith.subf %152, %153 : vector<8x128xf32>
    %155 = arith.mulf %154, %144 : vector<8x128xf32>
    %156 = arith.mulf %155, %138 : vector<8x128xf32>
    %157 = arith.addf %156, %138 : vector<8x128xf32>
    %158 = arith.addf %143, %157 : vector<8x128xf32>
    %159 = arith.mulf %116, %158 : vector<8x128xf32>
    %cst_58 = arith.constant 2.000000e+00 : f32
    %160 = vector.broadcast %cst_58 : f32 to vector<8x128xf32>
    %161 = arith.mulf %160, %159 : vector<8x128xf32>
    %162 = arith.mulf %161, %99 : vector<8x128xf32>
    %cst_59 = arith.constant 0.000000e+00 : f32
    %163 = vector.broadcast %cst_59 : f32 to vector<8x128xf32>
    %164 = arith.cmpf ogt, %91, %163 : vector<8x128xf32>
    %cst_60 = arith.constant 3.14159274 : f32
    %cst_61 = arith.constant -3.14159274 : f32
    %165 = vector.broadcast %cst_60 : f32 to vector<8x128xf32>
    %166 = vector.broadcast %cst_61 : f32 to vector<8x128xf32>
    %167 = arith.select %164, %165, %166 : vector<8x128xi1>, vector<8x128xf32>
    %168 = arith.mulf %167, %99 : vector<8x128xf32>
    %cst_62 = arith.constant 2.000000e+00 : f32
    %169 = vector.broadcast %cst_62 : f32 to vector<8x128xf32>
    %170 = arith.mulf %169, %110 : vector<8x128xf32>
    %cst_63 = arith.constant 0.666666686 : f32
    %171 = vector.broadcast %cst_63 : f32 to vector<8x128xf32>
    %172 = arith.mulf %171, %96 : vector<8x128xf32>
    %173 = arith.mulf %172, %110 : vector<8x128xf32>
    %174 = arith.mulf %173, %110 : vector<8x128xf32>
    %175 = arith.mulf %174, %110 : vector<8x128xf32>
    %176 = arith.subf %170, %175 : vector<8x128xf32>
    %cst_64 = arith.constant 1.1920929E-7 : f32
    %177 = vector.broadcast %cst_64 : f32 to vector<8x128xf32>
    %178 = arith.cmpf ogt, %100, %177 : vector<8x128xf32>
    %179 = math.absf %91 : vector<8x128xf32>
    %cst_65 = arith.constant 1.1920929E-7 : f32
    %180 = vector.broadcast %cst_65 : f32 to vector<8x128xf32>
    %181 = arith.cmpf ogt, %179, %180 : vector<8x128xf32>
    %182 = arith.select %181, %162, %168 : vector<8x128xi1>, vector<8x128xf32>
    %183 = arith.select %178, %182, %176 : vector<8x128xi1>, vector<8x128xf32>
    %184 = arith.mulf %183, %70 : vector<8x128xf32>
    %185 = arith.mulf %183, %77 : vector<8x128xf32>
    %186 = arith.mulf %183, %84 : vector<8x128xf32>
    %187 = arith.mulf %183, %100 : vector<8x128xf32>
    %188 = math.absf %187 : vector<8x128xf32>
    %cst_66 = arith.constant 1.1920929E-7 : f32
    %189 = vector.broadcast %cst_66 : f32 to vector<8x128xf32>
    %190 = arith.cmpf ole, %188, %189 : vector<8x128xf32>
    %cst_67 = arith.constant 1.000000e+00 : f32
    %191 = vector.broadcast %cst_67 : f32 to vector<8x128xf32>
    %192 = arith.select %190, %191, %187 : vector<8x128xi1>, vector<8x128xf32>
    %193 = tpu.reciprocal %192 {approx = true} : vector<8x128xf32> -> vector<8x128xf32>
    %194 = arith.mulf %192, %193 : vector<8x128xf32>
    %cst_68 = arith.constant 2.000000e+00 : f32
    %195 = vector.broadcast %cst_68 : f32 to vector<8x128xf32>
    %196 = arith.subf %195, %194 : vector<8x128xf32>
    %197 = arith.mulf %193, %196 : vector<8x128xf32>
    %198 = arith.mulf %197, %197 : vector<8x128xf32>
    %cst_69 = arith.constant 5.000000e-01 : f32
    %199 = vector.broadcast %cst_69 : f32 to vector<8x128xf32>
    %200 = arith.mulf %199, %91 : vector<8x128xf32>
    %201 = arith.mulf %200, %197 : vector<8x128xf32>
    %202 = arith.mulf %201, %99 : vector<8x128xf32>
    %203 = arith.subf %198, %202 : vector<8x128xf32>
    %cst_70 = arith.constant 0.0833333358 : f32
    %204 = vector.broadcast %cst_70 : f32 to vector<8x128xf32>
    %205 = arith.select %190, %204, %203 : vector<8x128xi1>, vector<8x128xf32>
    %206 = arith.mulf %185, %63 : vector<8x128xf32>
    %207 = arith.mulf %186, %57 : vector<8x128xf32>
    %208 = arith.subf %206, %207 : vector<8x128xf32>
    %209 = arith.mulf %186, %51 : vector<8x128xf32>
    %210 = arith.mulf %184, %63 : vector<8x128xf32>
    %211 = arith.subf %209, %210 : vector<8x128xf32>
    %212 = arith.mulf %184, %57 : vector<8x128xf32>
    %213 = arith.mulf %185, %51 : vector<8x128xf32>
    %214 = arith.subf %212, %213 : vector<8x128xf32>
    %215 = arith.mulf %185, %214 : vector<8x128xf32>
    %216 = arith.mulf %186, %211 : vector<8x128xf32>
    %217 = arith.subf %215, %216 : vector<8x128xf32>
    %218 = arith.mulf %186, %208 : vector<8x128xf32>
    %219 = arith.mulf %184, %214 : vector<8x128xf32>
    %220 = arith.subf %218, %219 : vector<8x128xf32>
    %221 = arith.mulf %184, %211 : vector<8x128xf32>
    %222 = arith.mulf %185, %208 : vector<8x128xf32>
    %223 = arith.subf %221, %222 : vector<8x128xf32>
    %cst_71 = arith.constant 5.000000e-01 : f32
    %224 = vector.broadcast %cst_71 : f32 to vector<8x128xf32>
    %225 = arith.mulf %224, %208 : vector<8x128xf32>
    %226 = arith.subf %51, %225 : vector<8x128xf32>
    %227 = arith.mulf %205, %217 : vector<8x128xf32>
    %228 = arith.addf %226, %227 : vector<8x128xf32>
    %cst_72 = arith.constant 5.000000e-01 : f32
    %229 = vector.broadcast %cst_72 : f32 to vector<8x128xf32>
    %230 = arith.mulf %229, %211 : vector<8x128xf32>
    %231 = arith.subf %57, %230 : vector<8x128xf32>
    %232 = arith.mulf %205, %220 : vector<8x128xf32>
    %233 = arith.addf %231, %232 : vector<8x128xf32>
    %cst_73 = arith.constant 5.000000e-01 : f32
    %234 = vector.broadcast %cst_73 : f32 to vector<8x128xf32>
    %235 = arith.mulf %234, %214 : vector<8x128xf32>
    %236 = arith.subf %63, %235 : vector<8x128xf32>
    %237 = arith.mulf %205, %223 : vector<8x128xf32>
    %238 = arith.addf %236, %237 : vector<8x128xf32>
    %c0_74 = arith.constant 0 : index
    %c0_75 = arith.constant 0 : index
    %c0_76 = arith.constant 0 : index
    %239 = vector.load %arg3[%c0_74, %c0_75, %c0_76] : memref<6x8x128xf32, #tpu.memory_space<vmem>>, vector<1x8x128xf32>
    %240 = vector.shape_cast %239 : vector<1x8x128xf32> to vector<8x128xf32>
    %241 = vector.shape_cast %228 : vector<8x128xf32> to vector<1x8x128xf32>
    tpu.vector_store %arg3[%c0_74, %c0_75, %c0_76], %241 {strides = array<i32>} : memref<6x8x128xf32, #tpu.memory_space<vmem>>, vector<1x8x128xf32>,
    %c1_77 = arith.constant 1 : index
    %c0_78 = arith.constant 0 : index
    %c0_79 = arith.constant 0 : index
    %242 = vector.load %arg3[%c1_77, %c0_78, %c0_79] : memref<6x8x128xf32, #tpu.memory_space<vmem>>, vector<1x8x128xf32>
    %243 = vector.shape_cast %242 : vector<1x8x128xf32> to vector<8x128xf32>
    %244 = vector.shape_cast %233 : vector<8x128xf32> to vector<1x8x128xf32>
    tpu.vector_store %arg3[%c1_77, %c0_78, %c0_79], %244 {strides = array<i32>} : memref<6x8x128xf32, #tpu.memory_space<vmem>>, vector<1x8x128xf32>,
    %c2_80 = arith.constant 2 : index
    %c0_81 = arith.constant 0 : index
    %c0_82 = arith.constant 0 : index
    %245 = vector.load %arg3[%c2_80, %c0_81, %c0_82] : memref<6x8x128xf32, #tpu.memory_space<vmem>>, vector<1x8x128xf32>
    %246 = vector.shape_cast %245 : vector<1x8x128xf32> to vector<8x128xf32>
    %247 = vector.shape_cast %238 : vector<8x128xf32> to vector<1x8x128xf32>
    tpu.vector_store %arg3[%c2_80, %c0_81, %c0_82], %247 {strides = array<i32>} : memref<6x8x128xf32, #tpu.memory_space<vmem>>, vector<1x8x128xf32>,
    %c3_83 = arith.constant 3 : index
    %c0_84 = arith.constant 0 : index
    %c0_85 = arith.constant 0 : index
    %248 = vector.load %arg3[%c3_83, %c0_84, %c0_85] : memref<6x8x128xf32, #tpu.memory_space<vmem>>, vector<1x8x128xf32>
    %249 = vector.shape_cast %248 : vector<1x8x128xf32> to vector<8x128xf32>
    %250 = vector.shape_cast %184 : vector<8x128xf32> to vector<1x8x128xf32>
    tpu.vector_store %arg3[%c3_83, %c0_84, %c0_85], %250 {strides = array<i32>} : memref<6x8x128xf32, #tpu.memory_space<vmem>>, vector<1x8x128xf32>,
    %c4_86 = arith.constant 4 : index
    %c0_87 = arith.constant 0 : index
    %c0_88 = arith.constant 0 : index
    %251 = vector.load %arg3[%c4_86, %c0_87, %c0_88] : memref<6x8x128xf32, #tpu.memory_space<vmem>>, vector<1x8x128xf32>
    %252 = vector.shape_cast %251 : vector<1x8x128xf32> to vector<8x128xf32>
    %253 = vector.shape_cast %185 : vector<8x128xf32> to vector<1x8x128xf32>
    tpu.vector_store %arg3[%c4_86, %c0_87, %c0_88], %253 {strides = array<i32>} : memref<6x8x128xf32, #tpu.memory_space<vmem>>, vector<1x8x128xf32>,
    %c5_89 = arith.constant 5 : index
    %c0_90 = arith.constant 0 : index
    %c0_91 = arith.constant 0 : index
    %254 = vector.load %arg3[%c5_89, %c0_90, %c0_91] : memref<6x8x128xf32, #tpu.memory_space<vmem>>, vector<1x8x128xf32>
    %255 = vector.shape_cast %254 : vector<1x8x128xf32> to vector<8x128xf32>
    %256 = vector.shape_cast %186 : vector<8x128xf32> to vector<1x8x128xf32>
    tpu.vector_store %arg3[%c5_89, %c0_90, %c0_91], %256 {strides = array<i32>} : memref<6x8x128xf32, #tpu.memory_space<vmem>>, vector<1x8x128xf32>,
    return
  }
  func.func @transform_0(%arg0: i32) -> (i32, i32, i32) {
    %c0_i32 = arith.constant 0 : i32
    %c0_i32_0 = arith.constant 0 : i32
    %c0_i32_1 = arith.constant 0 : i32
    return %c0_i32, %arg0, %c0_i32_0 : i32, i32, i32
  }
  func.func @transform_1(%arg0: i32) -> (i32, i32, i32) {
    %c0_i32 = arith.constant 0 : i32
    %c0_i32_0 = arith.constant 0 : i32
    %c0_i32_1 = arith.constant 0 : i32
    return %c0_i32, %arg0, %c0_i32_0 : i32, i32, i32
  }
  func.func @transform_2(%arg0: i32) -> (i32, i32, i32) {
    %c0_i32 = arith.constant 0 : i32
    %c0_i32_0 = arith.constant 0 : i32
    %c0_i32_1 = arith.constant 0 : i32
    return %c0_i32, %arg0, %c0_i32_0 : i32, i32, i32
  }
}

</mosaic_0001>

<llo_original>
// kernel: tpu_custom_call.1
$region0: #{tpu_custom_call.1}
  #allocation0 [shape = 'u32[]', space=smem, size = 0x4, offset = 0x4, fixed_abs, tag = 'smem constant byte address 0x4 - core index']
  #allocation1 [shape = 'u32[144,128]{1,0:T(1,128)}', space=vmem, size = 0x12000, scoped, tag = 'internal scratch']
  %s0 = inlined_call_operand.hbm [shape: f32[7,8,128], index: 0, kind: input, shape index: {}]
  %s1 = inlined_call_operand.hbm [shape: f32[7,8,128], index: 1, kind: input, shape index: {}]
  %s2 = inlined_call_operand.hbm [shape: f32[6,8,128], index: 2, kind: output, shape index: {}]
  %s3 = sld [smem:[#allocation0]]
  $region26: #{tpu_custom_call.1} parent=0
    _
  %s5 = ssub.s32 1, %s3
  %s6 = scalar_select 0, %s5, %s3
  $region1: #{tpu_custom_call.1} parent=0
    #allocation2 [shape = 'u8[28672]{0}', space=vmem, size = 0x7000, scoped, tag = 'input window, operand 0, single buffered']
    #allocation3 [shape = 's32[1]{0}', space=sflag, size = 0x4, scoped, tag = 'scoped memory for tpu_custom_call.1']
    #allocation4 [shape = 's32[1]{0}', space=sflag, size = 0x4, scoped, tag = 'scoped memory for tpu_custom_call.1']
    #allocation5 [shape = 'u8[28672]{0}', space=vmem, size = 0x7000, scoped, tag = 'input window, operand 1, single buffered']
    #allocation6 [shape = 's32[1]{0}', space=sflag, size = 0x4, scoped, tag = 'scoped memory for tpu_custom_call.1']
    #allocation7 [shape = 'u8[24576]{0}', space=vmem, size = 0x6000, scoped, tag = 'output window, operand 0, single buffered']
    %7 = vsyncpa [#allocation3], 0
    %8 = vsyncpa [#allocation6], 0
    %9 = vsyncpa [#allocation4], 0
    // Predicated region
    $region2: #{tpu_custom_call.1} parent=1 // pred_check
      _
    $region3: #{tpu_custom_call.1} parent=1 // pred_check_branch
      %11 = sbr.rel (0) target = $region5
    $region4: #{tpu_custom_call.1} parent=1 // pred_region
      %s13 = ssub.s32 896, 896
      %14 = vsyncadd [#allocation3], %s13
      %s15 = sshll.u32 [#allocation2], 4
      %s16 = int_to_ptr.vmem [resolvable:$true] %s15
      %21 = dma.hbm_to_vmem [thread:$0]  %s0, 896, %s16, [#allocation3], 128, 128, 8
    $region5: #{tpu_custom_call.1} parent=1 // pred_fallthru
      _
    // Predicated region
    $region6: #{tpu_custom_call.1} parent=1 // pred_check
      _
    $region7: #{tpu_custom_call.1} parent=1 // pred_check_branch
      %23 = sbr.rel (0) target = $region9
    $region8: #{tpu_custom_call.1} parent=1 // pred_region
      %s25 = ssub.s32 896, 896
      %26 = vsyncadd [#allocation6], %s25
      %s27 = sshll.u32 [#allocation5], 4
      %s28 = int_to_ptr.vmem [resolvable:$true] %s27
      %33 = dma.hbm_to_vmem [thread:$0]  %s1, 896, %s28, [#allocation6], 128, 128, 8
    $region9: #{tpu_custom_call.1} parent=1 // pred_fallthru
      _
    // Predicated region
    $region10: #{tpu_custom_call.1} parent=1 // pred_check
      _
    $region11: #{tpu_custom_call.1} parent=1 // pred_check_branch
      %35 = sbr.rel (0) target = $region13
    $region12: #{tpu_custom_call.1} parent=1 // pred_region
      %36 = dma.done [#allocation3], 896
    $region13: #{tpu_custom_call.1} parent=1 // pred_fallthru
      _
    // Predicated region
    $region14: #{tpu_custom_call.1} parent=1 // pred_check
      _
    $region15: #{tpu_custom_call.1} parent=1 // pred_check_branch
      %38 = sbr.rel (0) target = $region17
    $region16: #{tpu_custom_call.1} parent=1 // pred_region
      %39 = dma.done [#allocation6], 896
    $region17: #{tpu_custom_call.1} parent=1 // pred_fallthru
      _
    %v40 = vld [vmem:[#allocation2] sm:$0xff]
    %s41 = scalar_lea.vmem [#allocation2], 8
    %v42 = vld [vmem:[%s41] sm:$0xff]
    %s43 = scalar_lea.vmem [#allocation2], 16
    %v44 = vld [vmem:[%s43] sm:$0xff]
    %s45 = scalar_lea.vmem [#allocation2], 24
    %v46 = vld [vmem:[%s45] sm:$0xff]
    %s47 = scalar_lea.vmem [#allocation2], 32
    %v48 = vld [vmem:[%s47] sm:$0xff]
    %s49 = scalar_lea.vmem [#allocation2], 40
    %v50 = vld [vmem:[%s49] sm:$0xff]
    %s51 = scalar_lea.vmem [#allocation2], 48
    %v52 = vld [vmem:[%s51] sm:$0xff]
    %v53 = vld [vmem:[#allocation5] sm:$0xff]
    %s54 = scalar_lea.vmem [#allocation5], 8
    %v55 = vld [vmem:[%s54] sm:$0xff]
    %s56 = scalar_lea.vmem [#allocation5], 16
    %v57 = vld [vmem:[%s56] sm:$0xff]
    %s58 = scalar_lea.vmem [#allocation5], 24
    %v59 = vld [vmem:[%s58] sm:$0xff]
    %s60 = scalar_lea.vmem [#allocation5], 32
    %v61 = vld [vmem:[%s60] sm:$0xff]
    %s62 = scalar_lea.vmem [#allocation5], 40
    %v63 = vld [vmem:[%s62] sm:$0xff]
    %s64 = scalar_lea.vmem [#allocation5], 48
    %v65 = vld [vmem:[%s64] sm:$0xff]
    %v66 = vmul.f32 %v48, %v57
    %v67 = vmul.f32 %v50, %v55
    %v68 = vsub.f32 %v66, %v67
    %v69 = vmul.f32 %v50, %v53
    %v70 = vmul.f32 %v46, %v57
    %v71 = vsub.f32 %v69, %v70
    %v72 = vmul.f32 %v46, %v55
    %v73 = vmul.f32 %v48, %v53
    %v74 = vsub.f32 %v72, %v73
    %v75 = vmul.f32 %v48, %v74
    %v76 = vmul.f32 %v50, %v71
    %v77 = vsub.f32 %v75, %v76
    %v78 = vmul.f32 %v50, %v68
    %v79 = vmul.f32 %v46, %v74
    %v80 = vsub.f32 %v78, %v79
    %v81 = vmul.f32 %v46, %v71
    %v82 = vmul.f32 %v48, %v68
    %v83 = vsub.f32 %v81, %v82
    %v84 = vadd.f32 %v40, %v53
    %v85 = vmul.f32 %v52, %v68
    %v86 = vadd.f32 %v85, %v77
    %v87 = vmul.f32 %v86, 2.0
    %v88 = vadd.f32 %v84, %v87
    %v89 = vadd.f32 %v42, %v55
    %v90 = vmul.f32 %v52, %v71
    %v91 = vadd.f32 %v90, %v80
    %v92 = vmul.f32 %v91, 2.0
    %v93 = vadd.f32 %v89, %v92
    %v94 = vadd.f32 %v44, %v57
    %v95 = vmul.f32 %v52, %v74
    %v96 = vadd.f32 %v95, %v83
    %v97 = vmul.f32 %v96, 2.0
    %v98 = vadd.f32 %v94, %v97
    %v99 = vmul.f32 %v52, %v59
    %v100 = vmul.f32 %v46, %v65
    %v101 = vadd.f32 %v99, %v100
    %v102 = vmul.f32 %v48, %v63
    %v103 = vadd.f32 %v101, %v102
    %v104 = vmul.f32 %v50, %v61
    %v105 = vsub.f32 %v103, %v104
    %v106 = vmul.f32 %v52, %v61
    %v107 = vmul.f32 %v46, %v63
    %v108 = vsub.f32 %v106, %v107
    %v109 = vmul.f32 %v48, %v65
    %v110 = vadd.f32 %v108, %v109
    %v111 = vmul.f32 %v50, %v59
    %v112 = vadd.f32 %v110, %v111
    %v113 = vmul.f32 %v52, %v63
    %v114 = vmul.f32 %v46, %v61
    %v115 = vadd.f32 %v113, %v114
    %v116 = vmul.f32 %v48, %v59
    %v117 = vsub.f32 %v115, %v116
    %v118 = vmul.f32 %v50, %v65
    %v119 = vadd.f32 %v117, %v118
    %v120 = vmul.f32 %v52, %v65
    %v121 = vmul.f32 %v46, %v59
    %v122 = vsub.f32 %v120, %v121
    %v123 = vmul.f32 %v48, %v61
    %v124 = vsub.f32 %v122, %v123
    %v125 = vmul.f32 %v50, %v63
    %v126 = vsub.f32 %v124, %v125
    %v127 = vmul.f32 %v105, %v105
    %v128 = vmul.f32 %v112, %v112
    %v129 = vadd.f32 %v127, %v128
    %v130 = vmul.f32 %v119, %v119
    %v131 = vadd.f32 %v129, %v130
    %v132 = vmax.f32 %v131, 1e-30
    %v133 = vrsqrt.pop %v132
    %v134 = vmul.f32 %v131, %v133
    %v135 = vand.u32 2147483647, %v126
    %vm136 = vcmp.gt.f32.partialorder %v135, 1.1920929e-07
    %v137 = vsel %vm136, %v126, 1.0
    %v138 = vrcp.pop %v137
    %v139 = vmul.f32 %v137, %v138
    %v140 = vsub.f32 2.0, %v139
    %v141 = vmul.f32 %v138, %v140
    %v142 = vmul.f32 %v134, %v141
    %vm143 = vcmp.lt.f32.partialorder %v142, 0.0
    %v144 = vsel %vm143, -1.0, 1.0
    %v145 = vand.u32 2147483647, %v142
    %vm146 = vcmp.gt.f32.partialorder %v145, 2.4142137
    %vm147 = vcmp.gt.f32.partialorder %v145, 0.41421357
    %v148 = vadd.f32 %v145, 1.0
    %v149 = vsel %vm147, %v148, 1.0
    %v150 = vsel %vm146, %v145, %v149
    %v151 = vrcp.pop %v150
    %v152 = vmul.f32 %v150, %v151
    %v153 = vsub.f32 2.0, %v152
    %v154 = vmul.f32 %v151, %v153
    %v155 = vsub.f32 0.0, %v154
    %v156 = vsub.f32 %v145, 1.0
    %v157 = vmul.f32 %v156, %v154
    %v158 = vsel %vm147, %v157, %v145
    %v159 = vsel %vm146, %v155, %v158
    %v160 = vsel %vm147, 0.7853982, 0.0
    %v161 = vsel %vm146, 1.5707964, %v160
    %v162 = vmul.f32 %v159, %v159
    %v163 = vmul.f32 %v162, 0.080537446
    %v164 = vsub.f32 %v163, 0.13877685
    %v165 = vmul.f32 %v164, %v162
    %v166 = vadd.f32 %v165, 0.19977711
    %v167 = vmul.f32 %v166, %v162
    %v168 = vsub.f32 %v167, 0.3333295
    %v169 = vmul.f32 %v168, %v162
    %v170 = vmul.f32 %v169, %v159
    %v171 = vadd.f32 %v170, %v159
    %v172 = vadd.f32 %v161, %v171
    %v173 = vmul.f32 %v144, %v172
    %v174 = vmul.f32 %v173, 2.0
    %v175 = vmul.f32 %v174, %v133
    %vm176 = vcmp.gt.f32.partialorder %v126, 0.0
    %v177 = vsel %vm176, 3.1415927, -3.1415927
    %v178 = vmul.f32 %v177, %v133
    %v179 = vmul.f32 %v141, 2.0
    %v180 = vmul.f32 %v131, 0.6666667
    %v181 = vmul.f32 %v180, %v141
    %v182 = vmul.f32 %v181, %v141
    %v183 = vmul.f32 %v182, %v141
    %v184 = vsub.f32 %v179, %v183
    %vm185 = vcmp.gt.f32.partialorder %v134, 1.1920929e-07
    %v186 = vsel %vm136, %v175, %v178
    %v187 = vsel %vm185, %v186, %v184
    %v188 = vmul.f32 %v187, %v105
    %v189 = vmul.f32 %v187, %v112
    %v190 = vmul.f32 %v187, %v119
    %v191 = vmul.f32 %v187, %v134
    %v192 = vand.u32 2147483647, %v191
    %vm193 = vcmp.le.f32.partialorder %v192, 1.1920929e-07
    %v194 = vsel %vm193, 1.0, %v191
    %v195 = vrcp.pop %v194
    %v196 = vmul.f32 %v194, %v195
    %v197 = vsub.f32 2.0, %v196
    %v198 = vmul.f32 %v195, %v197
    %v199 = vmul.f32 %v198, %v198
    %v200 = vmul.f32 %v126, 0.5
    %v201 = vmul.f32 %v200, %v198
    %v202 = vmul.f32 %v201, %v133
    %v203 = vsub.f32 %v199, %v202
    %v204 = vsel %vm193, 0.083333336, %v203
    %v205 = vmul.f32 %v189, %v98
    %v206 = vmul.f32 %v190, %v93
    %v207 = vsub.f32 %v205, %v206
    %v208 = vmul.f32 %v190, %v88
    %v209 = vmul.f32 %v188, %v98
    %v210 = vsub.f32 %v208, %v209
    %v211 = vmul.f32 %v188, %v93
    %v212 = vmul.f32 %v189, %v88
    %v213 = vsub.f32 %v211, %v212
    %v214 = vmul.f32 %v189, %v213
    %v215 = vmul.f32 %v190, %v210
    %v216 = vsub.f32 %v214, %v215
    %v217 = vmul.f32 %v190, %v207
    %v218 = vmul.f32 %v188, %v213
    %v219 = vsub.f32 %v217, %v218
    %v220 = vmul.f32 %v188, %v210
    %v221 = vmul.f32 %v189, %v207
    %v222 = vsub.f32 %v220, %v221
    %v223 = vmul.f32 %v207, 0.5
    %v224 = vsub.f32 %v88, %v223
    %v225 = vmul.f32 %v204, %v216
    %v226 = vadd.f32 %v224, %v225
    %v227 = vmul.f32 %v210, 0.5
    %v228 = vsub.f32 %v93, %v227
    %v229 = vmul.f32 %v204, %v219
    %v230 = vadd.f32 %v228, %v229
    %v231 = vmul.f32 %v213, 0.5
    %v232 = vsub.f32 %v98, %v231
    %v233 = vmul.f32 %v204, %v222
    %v234 = vadd.f32 %v232, %v233
    %235 = vst [vmem:[#allocation7] sm:$0xff] %v226
    %s236 = scalar_lea.vmem [#allocation7], 8
    %237 = vst [vmem:[%s236] sm:$0xff] %v230
    %s238 = scalar_lea.vmem [#allocation7], 16
    %239 = vst [vmem:[%s238] sm:$0xff] %v234
    %s240 = scalar_lea.vmem [#allocation7], 24
    %241 = vst [vmem:[%s240] sm:$0xff] %v188
    %s242 = scalar_lea.vmem [#allocation7], 32
    %243 = vst [vmem:[%s242] sm:$0xff] %v189
    %s244 = scalar_lea.vmem [#allocation7], 40
    %245 = vst [vmem:[%s244] sm:$0xff] %v190
    // Predicated region
    $region18: #{tpu_custom_call.1} parent=1 // pred_check
      _
    $region19: #{tpu_custom_call.1} parent=1 // pred_check_branch
      %247 = sbr.rel (0) target = $region21
    $region20: #{tpu_custom_call.1} parent=1 // pred_region
      %s249 = ssub.s32 768, 768
      %250 = vsyncadd [#allocation4], %s249
      %s251 = sshll.u32 [#allocation7], 4
      %s252 = int_to_ptr.vmem [resolvable:$true] %s251
      %257 = dma.vmem_to_hbm [thread:$0]  %s252, 768, %s2, [#allocation4], 128, 128, 8
    $region21: #{tpu_custom_call.1} parent=1 // pred_fallthru
      _
    // Predicated region
    $region22: #{tpu_custom_call.1} parent=1 // pred_check
      _
    $region23: #{tpu_custom_call.1} parent=1 // pred_check_branch
      %259 = sbr.rel (0) target = $region25
    $region24: #{tpu_custom_call.1} parent=1 // pred_region
      %260 = dma.done [#allocation4], 768
    $region25: #{tpu_custom_call.1} parent=1 // pred_fallthru
      _
    %261 = vsyncpa [#allocation3], 1
    %262 = vsyncpa [#allocation6], 1
    %263 = vsyncpa [#allocation4], 1

</llo_original>
